<compile_context>
chip_gen: v7x
topology: tpu7x:2x2x1
jax: 0.10.0
libtpu: 0.0.40
codegen_flags: <defaults>
</compile_context>

<pallas_src>
import jax
import jax.numpy as jnp
from jax.experimental import pallas as pl
from jax.experimental.pallas import tpu as pltpu

LANES = 128
MAX_TILE_ROWS = 16384           # 8 MiB f32 per block upper bound


def _num_tensorcores():
    """Best-effort TensorCores-per-chip (perf only; any answer is correct)."""
    try:
        kind = jax.devices()[0].device_kind.lower()
    except Exception:
        return 1
    # 1-TC chips (and v2/v3 where each TC is its own JAX device).
    if ("lite" in kind or "v5e" in kind or "v6e" in kind
            or "v6 lite" in kind or "v2" in kind or "v3" in kind):
        return 1
    if "v4" in kind or "v5p" in kind or "v7" in kind:
        return 2
    return 1


def _sum_call(x2d, rows, tile_rows, n_cores, core_parallel):
    """One pallas_call computing per-core (acc_sub, LANES) partial sums."""
    itemsize = jnp.dtype(x2d.dtype).itemsize
    nb = pl.cdiv(rows, tile_rows)                 # logical row blocks
    blocks_per_core = pl.cdiv(nb, n_cores)
    nb_padded = n_cores * blocks_per_core         # grid coverage (>= nb)
    full_blocks = rows // tile_rows               # blocks fully in range
    need_edge = full_blocks < nb_padded           # partial / duplicated blocks
    acc_sub = 8 if tile_rows % 8 == 0 else 1      # accumulator sublane depth

    def kernel(x_ref, o_ref):
        c = pl.program_id(0)                      # core shard (parallel)
        i = pl.program_id(1)                      # row block   (reduction)

        @pl.when(i == 0)
        def _init():
            o_ref[...] = jnp.zeros_like(o_ref)

        x32 = x_ref[...].astype(jnp.float32)      # (tile_rows, 128)

        def add(xt):
            # Vreg-aligned partial reduce: pure VALU adds, no XLU in the loop.
            o_ref[...] += xt.reshape(-1, acc_sub, LANES).sum(
                axis=0, keepdims=True)

        if need_edge:
            blk = c * blocks_per_core + i         # unclamped logical block

            @pl.when(blk < full_blocks)           # interior block: mask-free
            def _full():
                add(x32)

            @pl.when(blk >= full_blocks)          # partial / duplicated block
            def _edge():
                row_ids = blk * tile_rows + jax.lax.broadcasted_iota(
                    jnp.int32, x32.shape, 0)
                add(jnp.where(row_ids < rows, x32, 0.0))
        else:
            add(x32)

    def x_index_map(c, i):
        # Clamp so the DMA window always stays inside the array; logically
        # out-of-range blocks contribute zero via the edge mask above.
        return (jnp.minimum(c * blocks_per_core + i, nb - 1), 0)

    if core_parallel:
        sems = (pltpu.CORE_PARALLEL, pltpu.ARBITRARY)
    else:
        sems = ("arbitrary", "arbitrary")

    tile_bytes = tile_rows * LANES * itemsize
    vmem_limit = int(min(max(4 * tile_bytes + (2 << 20), 16 << 20), 60 << 20))

    partials = pl.pallas_call(
        kernel,
        out_shape=jax.ShapeDtypeStruct((n_cores, acc_sub, LANES), jnp.float32),
        grid=(n_cores, blocks_per_core),
        in_specs=[pl.BlockSpec((tile_rows, LANES), x_index_map)],
        out_specs=pl.BlockSpec((1, acc_sub, LANES), lambda c, i: (c, 0, 0)),
        compiler_params=pltpu.CompilerParams(
            dimension_semantics=sems,
            vmem_limit_bytes=vmem_limit),
        cost_estimate=pl.CostEstimate(
            flops=rows * LANES,
            transcendentals=0,
            bytes_accessed=rows * LANES * itemsize),
    )(x2d)

    return jnp.sum(partials, dtype=jnp.float32)


def _global_sum_pallas(x2d, tile_rows):
    """Global sum of a (rows, 128) slab via a Pallas streaming reduction."""
    rows = int(x2d.shape[0])
    itemsize = jnp.dtype(x2d.dtype).itemsize
    # Dtype-aware sublane packing: f32 -> 8, bf16 -> 16, int8/fp8 -> 32.
    sub = max(8, 32 // itemsize)
    tile_rows = int(max(sub, (min(int(tile_rows), MAX_TILE_ROWS) // sub) * sub))

    if rows <= tile_rows:
        # Single full-extent block: one DMA, no masking, trivial grid.
        return _sum_call(x2d, rows, rows, 1, core_parallel=False)

    n_cores = _num_tensorcores()
    if n_cores > 1:
        try:
            return _sum_call(x2d, rows, tile_rows, n_cores, core_parallel=True)
        except Exception:
            pass  # CORE_PARALLEL unsupported here -> serial single-core grid
    return _sum_call(x2d, rows, tile_rows, 1, core_parallel=False)


def test_forward(x, alpha_cell, w_cell, alpha_block, w_block, *,
                 tile_rows=8192):
    """Pallas equivalent of Test.forward. Returns shape (1,) float32."""
    n_total = x.size

    # Trivial scalar glue (2-element softmax + 1x1 linear weight folding).
    def enc_coeff(alpha, w):
        a = jax.nn.softmax(alpha.astype(jnp.float32))
        return (2.0 * a[0] + 4.0 * a[1]) * w.astype(jnp.float32).reshape(())

    coeff = enc_coeff(alpha_cell, w_cell) + enc_coeff(alpha_block, w_block)

    flat = x.reshape(-1)                       # zero-copy for contiguous x
    n_main = (n_total // LANES) * LANES
    rows = n_main // LANES

    # <128-element lane tail (only when numel % 128 != 0): summed in plain JAX.
    tail_sum = jnp.float32(0.0)
    if n_main < n_total:
        tail_sum = jnp.sum(flat[n_main:].astype(jnp.float32))

    if rows == 0:
        total = tail_sum
    else:
        main = flat if n_main == n_total else flat[:n_main]
        x2d = main.reshape(rows, LANES)        # zero-copy when numel % 128 == 0
        total = _global_sum_pallas(x2d, tile_rows) + tail_sum

    return (total * coeff / jnp.float32(n_total)).reshape(1)


if __name__ == "__main__":
    key = jax.random.PRNGKey(0)
    kx, kw1, kw2 = jax.random.split(key, 3)

    # Small NCDHW input consistent with the module (original uses 2,1,64,64,64).
    x = jax.random.uniform(kx, (2, 1, 16, 16, 16), dtype=jnp.float32)

    # Deterministic parameters (module __init__: alpha = zeros(2),
    # Linear(1,1,bias=False) weight shape (1,1)).
    alpha_cell = jnp.zeros((2,), jnp.float32)
    alpha_block = jnp.zeros((2,), jnp.float32)
    w_cell = jax.random.uniform(kw1, (1, 1), jnp.float32, -1.0, 1.0)
    w_block = jax.random.uniform(kw2, (1, 1), jnp.float32, -1.0, 1.0)

    out = jax.block_until_ready(
        test_forward(x, alpha_cell, w_cell, alpha_block, w_block))

    # Pure-JAX reference mirroring the PyTorch forward exactly.
    def enc_ref(xv, alpha, w):
        a = jax.nn.softmax(alpha)
        m = (2.0 * a[0] * xv + 4.0 * a[1] * xv).mean().reshape(1)
        return m @ w.T

    ref = enc_ref(x, alpha_cell, w_cell) + enc_ref(x, alpha_block, w_block)
    assert out.shape == (1,)
    assert jnp.allclose(out, ref, rtol=1e-5, atol=1e-6), (out, ref)
    print("KERNEL_OK")
</pallas_src>

<mosaic_0001>
module attributes {stable_mosaic.version = 11 : i64} {
  func.func @kernel(%arg0: i32, %arg1: i32, %arg2: memref<64x128xf32, #tpu.memory_space<vmem>>, %arg3: memref<1x8x128xf32, #tpu.memory_space<vmem>>) attributes {dimension_semantics = [#tpu.dimension_semantics<arbitrary>, #tpu.dimension_semantics<arbitrary>], iteration_bounds = array<i64: 1, 1>, scalar_prefetch = 0 : i64, scratch_operands = 0 : i64, tpu.core_type = #tpu.core_type<tc>, window_params = [{transform_indices = @transform_0, window_bounds = array<i64: 64, 128>}, {transform_indices = @transform_1, window_bounds = array<i64: 1, 8, 128>}]} {
    %c0_i32 = arith.constant 0 : i32
    %0 = arith.cmpi eq, %arg1, %c0_i32 : i32
    %1 = arith.extui %0 : i1 to i32
    %c0_i32_0 = arith.constant 0 : i32
    %2 = arith.cmpi ne, %1, %c0_i32_0 : i32
    scf.if %2 {
      %cst_8 = arith.constant 0.000000e+00 : f32
      %10 = vector.broadcast %cst_8 : f32 to vector<1x8x128xf32>
      %c0_9 = arith.constant 0 : index
      %c0_10 = arith.constant 0 : index
      %c0_11 = arith.constant 0 : index
      %11 = vector.load %arg3[%c0_9, %c0_10, %c0_11] : memref<1x8x128xf32, #tpu.memory_space<vmem>>, vector<1x8x128xf32>
      tpu.vector_store %arg3[%c0_9, %c0_10, %c0_11], %10 {strides = array<i32>} : memref<1x8x128xf32, #tpu.memory_space<vmem>>, vector<1x8x128xf32>,
    } else {
    }
    %c0 = arith.constant 0 : index
    %c0_1 = arith.constant 0 : index
    %3 = vector.load %arg2[%c0, %c0_1] : memref<64x128xf32, #tpu.memory_space<vmem>>, vector<64x128xf32>
    %c0_2 = arith.constant 0 : index
    %c0_3 = arith.constant 0 : index
    %c0_4 = arith.constant 0 : index
    %4 = vector.load %arg3[%c0_2, %c0_3, %c0_4] : memref<1x8x128xf32, #tpu.memory_space<vmem>>, vector<1x8x128xf32>
    %5 = vector.shape_cast %3 : vector<64x128xf32> to vector<8x8x128xf32>
    %cst = arith.constant dense<0.000000e+00> : vector<8x128xf32>
    %6 = vector.multi_reduction <add>, %5, %cst [0] : vector<8x8x128xf32> to vector<8x128xf32>
    %7 = vector.shape_cast %6 : vector<8x128xf32> to vector<1x8x128xf32>
    %8 = arith.addf %4, %7 : vector<1x8x128xf32>
    %c0_5 = arith.constant 0 : index
    %c0_6 = arith.constant 0 : index
    %c0_7 = arith.constant 0 : index
    %9 = vector.load %arg3[%c0_5, %c0_6, %c0_7] : memref<1x8x128xf32, #tpu.memory_space<vmem>>, vector<1x8x128xf32>
    tpu.vector_store %arg3[%c0_5, %c0_6, %c0_7], %8 {strides = array<i32>} : memref<1x8x128xf32, #tpu.memory_space<vmem>>, vector<1x8x128xf32>,
    return
  }
  func.func @transform_0(%arg0: i32, %arg1: i32) -> (i32, i32) {
    %c1_i32 = arith.constant 1 : i32
    %0 = arith.muli %arg0, %c1_i32 : i32
    %1 = arith.addi %0, %arg1 : i32
    %c0_i32 = arith.constant 0 : i32
    %2 = arith.minsi %1, %c0_i32 : i32
    %c0_i32_0 = arith.constant 0 : i32
    %c0_i32_1 = arith.constant 0 : i32
    return %2, %c0_i32_0 : i32, i32
  }
  func.func @transform_1(%arg0: i32, %arg1: i32) -> (i32, i32, i32) {
    %c0_i32 = arith.constant 0 : i32
    %c0_i32_0 = arith.constant 0 : i32
    %c0_i32_1 = arith.constant 0 : i32
    return %arg0, %c0_i32, %c0_i32_0 : i32, i32, i32
  }
}

</mosaic_0001>

<llo_original>
// kernel: tpu_custom_call.1
$region0: #{tpu_custom_call.1}
  #allocation0 [shape = 'u32[]', space=smem, size = 0x4, offset = 0x4, fixed_abs, tag = 'smem constant byte address 0x4 - core index']
  #allocation1 [shape = 'u32[144,128]{1,0:T(1,128)}', space=vmem, size = 0x12000, scoped, tag = 'internal scratch']
  %s0 = inlined_call_operand.hbm [shape: f32[64,128], index: 0, kind: input, shape index: {}]
  %s1 = inlined_call_operand.hbm [shape: f32[1,8,128], index: 1, kind: output, shape index: {}]
  %s2 = sld [smem:[#allocation0]]
  $region22: #{tpu_custom_call.1} parent=0
    _
  %s4 = ssub.s32 1, %s2
  %s5 = scalar_select 0, %s4, %s2
  $region1: #{tpu_custom_call.1} parent=0
    #allocation2 [shape = 'u8[32768]{0}', space=vmem, size = 0x8000, scoped, tag = 'input window, operand 0, single buffered']
    #allocation3 [shape = 's32[1]{0}', space=sflag, size = 0x4, scoped, tag = 'scoped memory for tpu_custom_call.1']
    #allocation4 [shape = 's32[1]{0}', space=sflag, size = 0x4, scoped, tag = 'scoped memory for tpu_custom_call.1']
    #allocation5 [shape = 'u8[4096]{0}', space=vmem, size = 0x1000, scoped, tag = 'output window, operand 0, single buffered']
    %6 = vsyncpa [#allocation3], 0
    %7 = vsyncpa [#allocation4], 0
    // Predicated region
    $region2: #{tpu_custom_call.1} parent=1 // pred_check
      _
    $region3: #{tpu_custom_call.1} parent=1 // pred_check_branch
      %9 = sbr.rel (0) target = $region5
    $region4: #{tpu_custom_call.1} parent=1 // pred_region
      %s10 = sadd.s32 0, 0
      %p11 = scmp.lt.s32.totalorder %s10, 0
      %s12 = scalar_select %p11, %s10, 0
      %s13 = smul.u32 8, %s12
      %s15 = ssub.s32 1024, 1024
      %16 = vsyncadd [#allocation3], %s15
      %s17 = smul.addr %s13, 128
      %s18 = scalar_lea.hbm %s0, %s17
      %s19 = sshll.u32 [#allocation2], 4
      %s20 = int_to_ptr.vmem [resolvable:$true] %s19
      %25 = dma.hbm_to_vmem [thread:$0]  %s18, 1024, %s20, [#allocation3], 128, 128, 8
    $region5: #{tpu_custom_call.1} parent=1 // pred_fallthru
      _
    // Predicated region
    $region6: #{tpu_custom_call.1} parent=1 // pred_check
      _
    $region7: #{tpu_custom_call.1} parent=1 // pred_check_branch
      %27 = sbr.rel (0) target = $region9
    $region8: #{tpu_custom_call.1} parent=1 // pred_region
      %28 = dma.done [#allocation3], 1024
    $region9: #{tpu_custom_call.1} parent=1 // pred_fallthru
      _
    %s29 = sadd.s32 0, 0
    %p30 = scmp.lt.s32.totalorder %s29, 0
    %s31 = scalar_select %p30, %s29, 0
    %s32 = smul.u32 8, %s31
    %p33 = scmp.eq.s32.totalorder 0, 0
    // Predicated region
    $region10: #{tpu_custom_call.1} parent=1 // pred_check
      %p34 = pneg %p33
    $region11: #{tpu_custom_call.1} parent=1 // pred_check_branch
      %36 = sbr.rel (%p34) target = $region13
    $region12: #{tpu_custom_call.1} parent=1 // pred_region
      %37 = vst [vmem:[#allocation5] sm:$0xff] 0.0
    $region13: #{tpu_custom_call.1} parent=1 // pred_fallthru
      _
    %v38 = vld [vmem:[#allocation2] sm:$0xff]
    %v39 = vld [vmem:[#allocation2 + $0x8] sm:$0xff]
    %v40 = vld [vmem:[#allocation2 + $0x10] sm:$0xff]
    %v41 = vld [vmem:[#allocation2 + $0x18] sm:$0xff]
    %v42 = vld [vmem:[#allocation2 + $0x20] sm:$0xff]
    %v43 = vld [vmem:[#allocation2 + $0x28] sm:$0xff]
    %v44 = vld [vmem:[#allocation2 + $0x30] sm:$0xff]
    %v45 = vld [vmem:[#allocation2 + $0x38] sm:$0xff]
    %v46 = vld [vmem:[#allocation5] sm:$0xff]
    %v47 = vadd.f32 %v38, %v39
    %v48 = vadd.f32 %v47, %v40
    %v49 = vadd.f32 %v48, %v41
    %v50 = vadd.f32 %v49, %v42
    %v51 = vadd.f32 %v50, %v43
    %v52 = vadd.f32 %v51, %v44
    %v53 = vadd.f32 %v52, %v45
    %v54 = vadd.f32 %v46, %v53
    %55 = vst [vmem:[#allocation5] sm:$0xff] %v54
    // Predicated region
    $region14: #{tpu_custom_call.1} parent=1 // pred_check
      _
    $region15: #{tpu_custom_call.1} parent=1 // pred_check_branch
      %57 = sbr.rel (0) target = $region17
    $region16: #{tpu_custom_call.1} parent=1 // pred_region
      %s59 = ssub.s32 128, 128
      %60 = vsyncadd [#allocation4], %s59
      %s62 = sshll.u32 [#allocation5], 4
      %s63 = int_to_ptr.vmem [resolvable:$true] %s62
      %65 = dma.vmem_to_hbm [thread:$0]  %s63, 128, %s1, [#allocation4]
    $region17: #{tpu_custom_call.1} parent=1 // pred_fallthru
      _
    // Predicated region
    $region18: #{tpu_custom_call.1} parent=1 // pred_check
      _
    $region19: #{tpu_custom_call.1} parent=1 // pred_check_branch
      %67 = sbr.rel (0) target = $region21
    $region20: #{tpu_custom_call.1} parent=1 // pred_region
      %68 = dma.done [#allocation4], 128
    $region21: #{tpu_custom_call.1} parent=1 // pred_fallthru
      _
    %69 = vsyncpa [#allocation3], 1
    %70 = vsyncpa [#allocation4], 1

</llo_original>
